<compile_context>
chip_gen: v5e
topology: v5e:2x2
jax: 0.10.0
libtpu: 0.0.40
codegen_flags: <defaults>
</compile_context>

<pallas_src>
import jax
import jax.numpy as jnp
from jax import lax
from jax.experimental import pallas as pl
from jax.experimental.pallas import tpu as pltpu

RMS_EPS = 1e-4    # RunningMeanStd epsilon
LN_EPS = 1e-5     # nn.LayerNorm default eps
LANES = 128       # TPU lane width; all feature dims here are <= 128


def _round_up(n, m):
    return (n + m - 1) // m * m


# ------------------------- static parameter layouts ---------------------------

def vec_layout(nail, hidden, hammer):
    """Row index + valid width of every 1-D parameter inside the f32 (rows,128) slab."""
    names_dims = [
        ("rms_mean", nail), ("rms_var", nail),
        # encoder MLPSkipper(nail, hidden, hammer)
        ("e_ln0_g", nail),   ("e_ln0_b", nail),
        ("e_ln1_g", hidden), ("e_ln1_b", hidden),
        ("e_ln2_g", hidden), ("e_ln2_b", hidden),
        ("e_b0", hidden), ("e_b1", hidden), ("e_b2", hidden), ("e_b3", hammer),
        # decoder MLPSkipper(hammer, hidden, nail)
        ("d_ln0_g", hammer), ("d_ln0_b", hammer),
        ("d_ln1_g", hidden), ("d_ln1_b", hidden),
        ("d_ln2_g", hidden), ("d_ln2_b", hidden),
        # d_b3 is pre-shifted to lane offset `hammer` and padded to full width
        ("d_b0", hidden), ("d_b1", hidden), ("d_b2", hidden), ("d_b3", LANES),
    ]
    layout = {name: (i, d) for i, (name, d) in enumerate(names_dims)}
    return layout, _round_up(len(names_dims), 8)


def w_layout(nail, hidden, hammer):
    """Row offset + (fan_in, fan_out) of every weight inside the bf16 (rows,128) slab."""
    order = [
        ("e_w0", nail, hidden), ("e_w1", hidden, hidden),
        ("e_w2", hidden, hidden), ("e_w3", hidden, hammer),
        ("d_w0", hammer, hidden), ("d_w1", hidden, hidden),
        ("d_w2", hidden, hidden),
        ("d_w3", hidden, LANES),   # pre-shifted to lane offset `hammer`, lane-padded
    ]
    layout, off = {}, 0
    for name, fi, fo in order:
        layout[name] = (off, fi, fo)
        off += _round_up(fi, 16)   # keep each weight's row block bf16-sublane aligned
    return layout, _round_up(off, 16)


def pack_vec_slab(vals, vl, rows):
    slab = jnp.zeros((rows, LANES), jnp.float32)
    for name, (i, d) in vl.items():
        slab = slab.at[i, :d].set(vals[name].astype(jnp.float32).reshape(d))
    return slab


def pack_w_slab(vals, wl, rows):
    slab = jnp.zeros((rows, LANES), jnp.bfloat16)
    for name, (off, fi, fo) in wl.items():
        slab = slab.at[off:off + fi, :fo].set(vals[name].astype(jnp.bfloat16))
    return slab


# ----------------------------------- kernel -----------------------------------

def make_kernel(nail, hidden, hammer, vl, wl):
    def vec(ref, name):                      # (1, d) static slice, f32
        i, d = vl[name]
        return ref[i:i + 1, :d]

    def wmat(ref, name):                     # (fi, fo) static slice, bf16
        off, fi, fo = wl[name]
        return ref[off:off + fi, :fo]

    def linear(x, w, b):
        # bf16 MXU operands, f32 accumulation / bias add.
        return jnp.dot(x.astype(jnp.bfloat16), w,
                       preferred_element_type=jnp.float32) + b

    def layernorm(x, g, b):
        # One-pass stats: independent XLU reductions, then rsqrt on the EUP.
        d = x.shape[-1]
        s1 = jnp.sum(x, axis=-1, keepdims=True)
        s2 = jnp.sum(x * x, axis=-1, keepdims=True)
        mean = s1 * (1.0 / d)
        var = s2 * (1.0 / d) - mean * mean
        return (x - mean) * lax.rsqrt(var + LN_EPS) * g + b

    def relu(x):
        return jnp.maximum(x, 0.0)

    def skipper(x, v_ref, w_ref, p):
        # MLPSkipper.forward
        x = layernorm(x, vec(v_ref, p + "_ln0_g"), vec(v_ref, p + "_ln0_b"))
        x = linear(x, wmat(w_ref, p + "_w0"), vec(v_ref, p + "_b0"))          # Linear
        x = linear(relu(x), wmat(w_ref, p + "_w1"), vec(v_ref, p + "_b1"))    # ReLU,Linear
        x = layernorm(x, vec(v_ref, p + "_ln1_g"), vec(v_ref, p + "_ln1_b"))
        y = linear(relu(x), wmat(w_ref, p + "_w2"), vec(v_ref, p + "_b2"))    # ReLU,Linear
        x = x + y                                                             # skip (f32)
        x = layernorm(x, vec(v_ref, p + "_ln2_g"), vec(v_ref, p + "_ln2_b"))
        x = linear(relu(x), wmat(w_ref, p + "_w3"), vec(v_ref, p + "_b3"))    # ReLU,Linear
        return x

    def kernel(x_ref, vec_ref, w_ref, out_ref):
        x = x_ref[...]
        # RunningMeanStd.normalize: clip((x - mean) * rsqrt(var + eps), -1000, 1000)
        xn = (x - vec(vec_ref, "rms_mean")) * lax.rsqrt(vec(vec_ref, "rms_var") + RMS_EPS)
        xn = jnp.clip(xn, -1000.0, 1000.0)

        z0 = jnp.tanh(skipper(xn, vec_ref, w_ref, "e"))   # (tile_b, hammer)
        # Decoder's final weight/bias are lane-shifted: output is (tile_b, 128)
        # with z1 at lanes [hammer, hammer+nail) and exact zeros elsewhere.
        z1_full = skipper(z0, vec_ref, w_ref, "d")

        out_ref[...] = z1_full            # one full unmasked lane-dense store
        out_ref[:, :hammer] = z0          # small masked sub-store of encoder output

    return kernel


# ------------------------------- plain-JAX state -------------------------------

def rms_update(mean, var, count, x):
    """RunningMeanStd.update (torch.var default is unbiased -> ddof=1)."""
    batch_mean = jnp.mean(x, axis=0)
    batch_count = x.shape[0]
    if batch_count > 1:
        batch_var = jnp.var(x, axis=0, ddof=1)
    else:
        # torch.var(unbiased) of a single row is NaN; guard with 0 instead.
        batch_var = jnp.zeros_like(batch_mean)
    delta = batch_mean - mean
    tot = count + batch_count
    new_mean = mean + delta * batch_count / tot
    m_a = var * count
    m_b = batch_var * batch_count
    m_2 = m_a + m_b + jnp.square(delta) * count * batch_count / tot
    new_var = m_2 / tot
    return new_mean, new_var, tot


# ----------------------------------- wrapper -----------------------------------

def mlp_skipper_ae_forward(x, params, rms_state, train_yes, tile_b=512):
    """Mirrors MLPSkipperAE.forward(x, train_yes) -> (encoded z0, decoded z1)."""
    rms_mean, rms_var, rms_count = rms_state
    if train_yes:
        rms_mean, rms_var, rms_count = rms_update(rms_mean, rms_var, rms_count, x)

    B, nail = x.shape
    hidden = params["e_w1"].shape[0]
    hammer = params["e_w3"].shape[1]
    assert max(nail, hidden, hammer) <= LANES and hammer + nail <= LANES, \
        "packed-slab kernel assumes all feature dims fit in 128 lanes"

    # Batch tiling: multiple of 8, capped so double-buffered tiles + live
    # activations stay small even on v7x's 64 MiB VMEM.
    tile_b = max(8, min(_round_up(tile_b, 8), _round_up(B, 8)))
    Bp = _round_up(B, tile_b)
    if Bp != B:
        x = jnp.pad(x, ((0, Bp - B), (0, 0)))
    n_tiles = Bp // tile_b

    vl, vrows = vec_layout(nail, hidden, hammer)
    wl, wrows = w_layout(nail, hidden, hammer)

    # Lane-shift the decoder's final Linear so z1 lands at lanes [hammer, hammer+nail).
    d_w3_wide = jnp.zeros((hidden, LANES), jnp.float32)
    d_w3_wide = d_w3_wide.at[:, hammer:hammer + nail].set(params["d_w3"].astype(jnp.float32))
    d_b3_wide = jnp.zeros((LANES,), jnp.float32)
    d_b3_wide = d_b3_wide.at[hammer:hammer + nail].set(params["d_b3"].astype(jnp.float32))

    all_vecs = dict(params)
    all_vecs["rms_mean"] = rms_mean
    all_vecs["rms_var"] = rms_var
    all_vecs["d_b3"] = d_b3_wide
    vec_slab = pack_vec_slab(all_vecs, vl, vrows)

    all_ws = dict(params)
    all_ws["d_w3"] = d_w3_wide
    wt_slab = pack_w_slab(all_ws, wl, wrows)

    flops = 2 * Bp * (nail * hidden + 4 * hidden * hidden
                      + 2 * hidden * hammer + hidden * LANES)
    transcendentals = Bp * (hammer + 7)              # tanh + rsqrt per LN / RMS
    bytes_accessed = 4 * x.size + 4 * vec_slab.size + 2 * wt_slab.size + 4 * Bp * LANES

    kernel = make_kernel(nail, hidden, hammer, vl, wl)
    out = pl.pallas_call(
        kernel,
        out_shape=jax.ShapeDtypeStruct((Bp, LANES), jnp.float32),
        grid_spec=pltpu.PrefetchScalarGridSpec(
            num_scalar_prefetch=0,
            grid=(n_tiles,),
            in_specs=[
                pl.BlockSpec((tile_b, nail), lambda i: (i, 0)),      # x: per-tile DMA
                pl.BlockSpec((vrows, LANES), lambda i: (0, 0)),      # resident params
                pl.BlockSpec((wrows, LANES), lambda i: (0, 0)),      # resident weights
            ],
            out_specs=pl.BlockSpec((tile_b, LANES), lambda i: (i, 0)),
        ),
        compiler_params=pltpu.CompilerParams(
            dimension_semantics=("parallel",)),                      # v7x megacore
        cost_estimate=pl.CostEstimate(
            flops=int(flops),
            transcendentals=int(transcendentals),
            bytes_accessed=int(bytes_accessed)),
    )(x, vec_slab, wt_slab)

    z0 = out[:B, :hammer]
    z1 = out[:B, hammer:hammer + nail]
    return (z0, z1), (rms_mean, rms_var, rms_count)


# ------------------------------ synthetic params -------------------------------

def init_params(key, nail, hidden, hammer):
    """PyTorch-default-style init: Linear U(-1/sqrt(fan_in), ..), LN gamma=1, beta=0."""
    def lin(k, fi, fo):
        kw, kb = jax.random.split(k)
        bound = 1.0 / float(fi) ** 0.5
        w = jax.random.uniform(kw, (fi, fo), jnp.float32, -bound, bound)
        b = jax.random.uniform(kb, (fo,), jnp.float32, -bound, bound)
        return w, b

    keys = jax.random.split(key, 8)
    p = {}
    # encoder MLPSkipper(nail, hidden, hammer)
    p["e_w0"], p["e_b0"] = lin(keys[0], nail, hidden)
    p["e_w1"], p["e_b1"] = lin(keys[1], hidden, hidden)
    p["e_w2"], p["e_b2"] = lin(keys[2], hidden, hidden)
    p["e_w3"], p["e_b3"] = lin(keys[3], hidden, hammer)
    for i, d in (("0", nail), ("1", hidden), ("2", hidden)):
        p[f"e_ln{i}_g"] = jnp.ones((d,), jnp.float32)
        p[f"e_ln{i}_b"] = jnp.zeros((d,), jnp.float32)
    # decoder MLPSkipper(hammer, hidden, nail)
    p["d_w0"], p["d_b0"] = lin(keys[4], hammer, hidden)
    p["d_w1"], p["d_b1"] = lin(keys[5], hidden, hidden)
    p["d_w2"], p["d_b2"] = lin(keys[6], hidden, hidden)
    p["d_w3"], p["d_b3"] = lin(keys[7], hidden, nail)
    for i, d in (("0", hammer), ("1", hidden), ("2", hidden)):
        p[f"d_ln{i}_g"] = jnp.ones((d,), jnp.float32)
        p[f"d_ln{i}_b"] = jnp.zeros((d,), jnp.float32)
    return p


# ----------------------------------- demo --------------------------------------

if __name__ == "__main__":
    B, NAIL, HIDDEN, HAMMER = 8, 16, 32, 8

    key = jax.random.PRNGKey(0)
    kx, kp = jax.random.split(key)
    x = jax.random.normal(kx, (B, NAIL), dtype=jnp.float32)
    params = init_params(kp, NAIL, HIDDEN, HAMMER)

    rms_state = (jnp.zeros((NAIL,), jnp.float32),   # RunningMeanStd.mean
                 jnp.ones((NAIL,), jnp.float32),    # RunningMeanStd.var
                 RMS_EPS)                           # count starts at epsilon

    (z0, z1), rms_state = mlp_skipper_ae_forward(x, params, rms_state, train_yes=True)
    jax.block_until_ready((z0, z1))

    assert z0.shape == (B, HAMMER)
    assert z1.shape == (B, NAIL)
    assert bool(jnp.all(jnp.isfinite(z0))) and bool(jnp.all(jnp.isfinite(z1)))
    assert bool(jnp.all(jnp.abs(z0) <= 1.0 + 1e-6))   # encoder ends in Tanh
    print("KERNEL_OK")
</pallas_src>

<mosaic_0001>
module attributes {stable_mosaic.version = 11 : i64} {
  func.func @kernel(%arg0: i32, %arg1: memref<8x16xf32, #tpu.memory_space<vmem>>, %arg2: memref<24x128xf32, #tpu.memory_space<vmem>>, %arg3: memref<224x128xbf16, #tpu.memory_space<vmem>>, %arg4: memref<8x128xf32, #tpu.memory_space<vmem>>) attributes {dimension_semantics = [#tpu.dimension_semantics<parallel>], iteration_bounds = array<i64: 1>, scalar_prefetch = 0 : i64, scratch_operands = 0 : i64, tpu.core_type = #tpu.core_type<tc>, window_params = [{transform_indices = @transform_0, window_bounds = array<i64: 8, 16>}, {pipeline_mode = #tpu.pipeline_mode<synchronous>, transform_indices = @transform_1, window_bounds = array<i64: 24, 128>}, {pipeline_mode = #tpu.pipeline_mode<synchronous>, transform_indices = @transform_2, window_bounds = array<i64: 224, 128>}, {transform_indices = @transform_3, window_bounds = array<i64: 8, 128>}]} {
    %c0 = arith.constant 0 : index
    %c0_0 = arith.constant 0 : index
    %0 = vector.load %arg1[%c0, %c0_0] : memref<8x16xf32, #tpu.memory_space<vmem>>, vector<8x16xf32>
    %c0_1 = arith.constant 0 : index
    %c0_2 = arith.constant 0 : index
    %1 = vector.load %arg2[%c0_1, %c0_2] : memref<24x128xf32, #tpu.memory_space<vmem>>, vector<1x16xf32>
    %2 = vector.broadcast %1 : vector<1x16xf32> to vector<8x16xf32>
    %3 = arith.subf %0, %2 : vector<8x16xf32>
    %c1 = arith.constant 1 : index
    %c0_3 = arith.constant 0 : index
    %4 = vector.load %arg2[%c1, %c0_3] : memref<24x128xf32, #tpu.memory_space<vmem>>, vector<1x16xf32>
    %cst = arith.constant 9.99999974E-5 : f32
    %5 = vector.broadcast %cst : f32 to vector<1x16xf32>
    %6 = arith.addf %4, %5 : vector<1x16xf32>
    %7 = math.rsqrt %6 : vector<1x16xf32>
    %8 = vector.broadcast %7 : vector<1x16xf32> to vector<8x16xf32>
    %9 = arith.mulf %3, %8 : vector<8x16xf32>
    %cst_4 = arith.constant -1.000000e+03 : f32
    %cst_5 = arith.constant 1.000000e+03 : f32
    %10 = vector.broadcast %cst_4 : f32 to vector<8x16xf32>
    %11 = arith.maximumf %10, %9 : vector<8x16xf32>
    %12 = vector.broadcast %cst_5 : f32 to vector<8x16xf32>
    %13 = arith.minimumf %12, %11 : vector<8x16xf32>
    %c2 = arith.constant 2 : index
    %c0_6 = arith.constant 0 : index
    %14 = vector.load %arg2[%c2, %c0_6] : memref<24x128xf32, #tpu.memory_space<vmem>>, vector<1x16xf32>
    %c3 = arith.constant 3 : index
    %c0_7 = arith.constant 0 : index
    %15 = vector.load %arg2[%c3, %c0_7] : memref<24x128xf32, #tpu.memory_space<vmem>>, vector<1x16xf32>
    %cst_8 = arith.constant dense<0.000000e+00> : vector<8xf32>
    %16 = vector.multi_reduction <add>, %13, %cst_8 [1] : vector<8x16xf32> to vector<8xf32>
    %17 = vector.shape_cast %16 : vector<8xf32> to vector<8x1xf32>
    %18 = arith.mulf %13, %13 : vector<8x16xf32>
    %cst_9 = arith.constant dense<0.000000e+00> : vector<8xf32>
    %19 = vector.multi_reduction <add>, %18, %cst_9 [1] : vector<8x16xf32> to vector<8xf32>
    %20 = vector.shape_cast %19 : vector<8xf32> to vector<8x1xf32>
    %cst_10 = arith.constant 6.250000e-02 : f32
    %21 = vector.broadcast %cst_10 : f32 to vector<8x1xf32>
    %22 = arith.mulf %17, %21 : vector<8x1xf32>
    %cst_11 = arith.constant 6.250000e-02 : f32
    %23 = vector.broadcast %cst_11 : f32 to vector<8x1xf32>
    %24 = arith.mulf %20, %23 : vector<8x1xf32>
    %25 = arith.mulf %22, %22 : vector<8x1xf32>
    %26 = arith.subf %24, %25 : vector<8x1xf32>
    %27 = vector.broadcast %22 : vector<8x1xf32> to vector<8x16xf32>
    %28 = arith.subf %13, %27 : vector<8x16xf32>
    %cst_12 = arith.constant 9.99999974E-6 : f32
    %29 = vector.broadcast %cst_12 : f32 to vector<8x1xf32>
    %30 = arith.addf %26, %29 : vector<8x1xf32>
    %31 = math.rsqrt %30 : vector<8x1xf32>
    %32 = vector.broadcast %31 : vector<8x1xf32> to vector<8x16xf32>
    %33 = arith.mulf %28, %32 : vector<8x16xf32>
    %34 = vector.broadcast %14 : vector<1x16xf32> to vector<8x16xf32>
    %35 = arith.mulf %33, %34 : vector<8x16xf32>
    %36 = vector.broadcast %15 : vector<1x16xf32> to vector<8x16xf32>
    %37 = arith.addf %35, %36 : vector<8x16xf32>
    %c0_13 = arith.constant 0 : index
    %c0_14 = arith.constant 0 : index
    %38 = vector.load %arg3[%c0_13, %c0_14] : memref<224x128xbf16, #tpu.memory_space<vmem>>, vector<16x32xbf16>
    %c8 = arith.constant 8 : index
    %c0_15 = arith.constant 0 : index
    %39 = vector.load %arg2[%c8, %c0_15] : memref<24x128xf32, #tpu.memory_space<vmem>>, vector<1x32xf32>
    %40 = arith.truncf %37 : vector<8x16xf32> to vector<8x16xbf16>
    %cst_16 = arith.constant dense<0.000000e+00> : vector<8x32xf32>
    %41 = tpu.matmul %40, %38, %cst_16 {dimension_numbers = #tpu.dot_dimension_numbers<[1], [0], [0], [1], [0, 0, 1, 1], [], []>} : vector<8x16xbf16>, vector<16x32xbf16>, vector<8x32xf32> -> vector<8x32xf32>
    %42 = vector.broadcast %39 : vector<1x32xf32> to vector<8x32xf32>
    %43 = arith.addf %41, %42 : vector<8x32xf32>
    %cst_17 = arith.constant 0.000000e+00 : f32
    %44 = vector.broadcast %cst_17 : f32 to vector<8x32xf32>
    %45 = arith.maximumf %43, %44 : vector<8x32xf32>
    %c16 = arith.constant 16 : index
    %c0_18 = arith.constant 0 : index
    %46 = vector.load %arg3[%c16, %c0_18] : memref<224x128xbf16, #tpu.memory_space<vmem>>, vector<32x32xbf16>
    %c9 = arith.constant 9 : index
    %c0_19 = arith.constant 0 : index
    %47 = vector.load %arg2[%c9, %c0_19] : memref<24x128xf32, #tpu.memory_space<vmem>>, vector<1x32xf32>
    %48 = arith.truncf %45 : vector<8x32xf32> to vector<8x32xbf16>
    %cst_20 = arith.constant dense<0.000000e+00> : vector<8x32xf32>
    %49 = tpu.matmul %48, %46, %cst_20 {dimension_numbers = #tpu.dot_dimension_numbers<[1], [0], [0], [1], [0, 0, 1, 1], [], []>} : vector<8x32xbf16>, vector<32x32xbf16>, vector<8x32xf32> -> vector<8x32xf32>
    %50 = vector.broadcast %47 : vector<1x32xf32> to vector<8x32xf32>
    %51 = arith.addf %49, %50 : vector<8x32xf32>
    %c4 = arith.constant 4 : index
    %c0_21 = arith.constant 0 : index
    %52 = vector.load %arg2[%c4, %c0_21] : memref<24x128xf32, #tpu.memory_space<vmem>>, vector<1x32xf32>
    %c5 = arith.constant 5 : index
    %c0_22 = arith.constant 0 : index
    %53 = vector.load %arg2[%c5, %c0_22] : memref<24x128xf32, #tpu.memory_space<vmem>>, vector<1x32xf32>
    %cst_23 = arith.constant dense<0.000000e+00> : vector<8xf32>
    %54 = vector.multi_reduction <add>, %51, %cst_23 [1] : vector<8x32xf32> to vector<8xf32>
    %55 = vector.shape_cast %54 : vector<8xf32> to vector<8x1xf32>
    %56 = arith.mulf %51, %51 : vector<8x32xf32>
    %cst_24 = arith.constant dense<0.000000e+00> : vector<8xf32>
    %57 = vector.multi_reduction <add>, %56, %cst_24 [1] : vector<8x32xf32> to vector<8xf32>
    %58 = vector.shape_cast %57 : vector<8xf32> to vector<8x1xf32>
    %cst_25 = arith.constant 3.125000e-02 : f32
    %59 = vector.broadcast %cst_25 : f32 to vector<8x1xf32>
    %60 = arith.mulf %55, %59 : vector<8x1xf32>
    %cst_26 = arith.constant 3.125000e-02 : f32
    %61 = vector.broadcast %cst_26 : f32 to vector<8x1xf32>
    %62 = arith.mulf %58, %61 : vector<8x1xf32>
    %63 = arith.mulf %60, %60 : vector<8x1xf32>
    %64 = arith.subf %62, %63 : vector<8x1xf32>
    %65 = vector.broadcast %60 : vector<8x1xf32> to vector<8x32xf32>
    %66 = arith.subf %51, %65 : vector<8x32xf32>
    %cst_27 = arith.constant 9.99999974E-6 : f32
    %67 = vector.broadcast %cst_27 : f32 to vector<8x1xf32>
    %68 = arith.addf %64, %67 : vector<8x1xf32>
    %69 = math.rsqrt %68 : vector<8x1xf32>
    %70 = vector.broadcast %69 : vector<8x1xf32> to vector<8x32xf32>
    %71 = arith.mulf %66, %70 : vector<8x32xf32>
    %72 = vector.broadcast %52 : vector<1x32xf32> to vector<8x32xf32>
    %73 = arith.mulf %71, %72 : vector<8x32xf32>
    %74 = vector.broadcast %53 : vector<1x32xf32> to vector<8x32xf32>
    %75 = arith.addf %73, %74 : vector<8x32xf32>
    %cst_28 = arith.constant 0.000000e+00 : f32
    %76 = vector.broadcast %cst_28 : f32 to vector<8x32xf32>
    %77 = arith.maximumf %75, %76 : vector<8x32xf32>
    %c48 = arith.constant 48 : index
    %c0_29 = arith.constant 0 : index
    %78 = vector.load %arg3[%c48, %c0_29] : memref<224x128xbf16, #tpu.memory_space<vmem>>, vector<32x32xbf16>
    %c10 = arith.constant 10 : index
    %c0_30 = arith.constant 0 : index
    %79 = vector.load %arg2[%c10, %c0_30] : memref<24x128xf32, #tpu.memory_space<vmem>>, vector<1x32xf32>
    %80 = arith.truncf %77 : vector<8x32xf32> to vector<8x32xbf16>
    %cst_31 = arith.constant dense<0.000000e+00> : vector<8x32xf32>
    %81 = tpu.matmul %80, %78, %cst_31 {dimension_numbers = #tpu.dot_dimension_numbers<[1], [0], [0], [1], [0, 0, 1, 1], [], []>} : vector<8x32xbf16>, vector<32x32xbf16>, vector<8x32xf32> -> vector<8x32xf32>
    %82 = vector.broadcast %79 : vector<1x32xf32> to vector<8x32xf32>
    %83 = arith.addf %81, %82 : vector<8x32xf32>
    %84 = arith.addf %75, %83 : vector<8x32xf32>
    %c6 = arith.constant 6 : index
    %c0_32 = arith.constant 0 : index
    %85 = vector.load %arg2[%c6, %c0_32] : memref<24x128xf32, #tpu.memory_space<vmem>>, vector<1x32xf32>
    %c7 = arith.constant 7 : index
    %c0_33 = arith.constant 0 : index
    %86 = vector.load %arg2[%c7, %c0_33] : memref<24x128xf32, #tpu.memory_space<vmem>>, vector<1x32xf32>
    %cst_34 = arith.constant dense<0.000000e+00> : vector<8xf32>
    %87 = vector.multi_reduction <add>, %84, %cst_34 [1] : vector<8x32xf32> to vector<8xf32>
    %88 = vector.shape_cast %87 : vector<8xf32> to vector<8x1xf32>
    %89 = arith.mulf %84, %84 : vector<8x32xf32>
    %cst_35 = arith.constant dense<0.000000e+00> : vector<8xf32>
    %90 = vector.multi_reduction <add>, %89, %cst_35 [1] : vector<8x32xf32> to vector<8xf32>
    %91 = vector.shape_cast %90 : vector<8xf32> to vector<8x1xf32>
    %cst_36 = arith.constant 3.125000e-02 : f32
    %92 = vector.broadcast %cst_36 : f32 to vector<8x1xf32>
    %93 = arith.mulf %88, %92 : vector<8x1xf32>
    %cst_37 = arith.constant 3.125000e-02 : f32
    %94 = vector.broadcast %cst_37 : f32 to vector<8x1xf32>
    %95 = arith.mulf %91, %94 : vector<8x1xf32>
    %96 = arith.mulf %93, %93 : vector<8x1xf32>
    %97 = arith.subf %95, %96 : vector<8x1xf32>
    %98 = vector.broadcast %93 : vector<8x1xf32> to vector<8x32xf32>
    %99 = arith.subf %84, %98 : vector<8x32xf32>
    %cst_38 = arith.constant 9.99999974E-6 : f32
    %100 = vector.broadcast %cst_38 : f32 to vector<8x1xf32>
    %101 = arith.addf %97, %100 : vector<8x1xf32>
    %102 = math.rsqrt %101 : vector<8x1xf32>
    %103 = vector.broadcast %102 : vector<8x1xf32> to vector<8x32xf32>
    %104 = arith.mulf %99, %103 : vector<8x32xf32>
    %105 = vector.broadcast %85 : vector<1x32xf32> to vector<8x32xf32>
    %106 = arith.mulf %104, %105 : vector<8x32xf32>
    %107 = vector.broadcast %86 : vector<1x32xf32> to vector<8x32xf32>
    %108 = arith.addf %106, %107 : vector<8x32xf32>
    %cst_39 = arith.constant 0.000000e+00 : f32
    %109 = vector.broadcast %cst_39 : f32 to vector<8x32xf32>
    %110 = arith.maximumf %108, %109 : vector<8x32xf32>
    %c80 = arith.constant 80 : index
    %c0_40 = arith.constant 0 : index
    %111 = vector.load %arg3[%c80, %c0_40] : memref<224x128xbf16, #tpu.memory_space<vmem>>, vector<32x8xbf16>
    %c11 = arith.constant 11 : index
    %c0_41 = arith.constant 0 : index
    %112 = vector.load %arg2[%c11, %c0_41] : memref<24x128xf32, #tpu.memory_space<vmem>>, vector<1x8xf32>
    %113 = arith.truncf %110 : vector<8x32xf32> to vector<8x32xbf16>
    %cst_42 = arith.constant dense<0.000000e+00> : vector<8x8xf32>
    %114 = tpu.matmul %113, %111, %cst_42 {dimension_numbers = #tpu.dot_dimension_numbers<[1], [0], [0], [1], [0, 0, 1, 1], [], []>} : vector<8x32xbf16>, vector<32x8xbf16>, vector<8x8xf32> -> vector<8x8xf32>
    %115 = vector.broadcast %112 : vector<1x8xf32> to vector<8x8xf32>
    %116 = arith.addf %114, %115 : vector<8x8xf32>
    %117 = math.tanh %116 : vector<8x8xf32>
    %c12 = arith.constant 12 : index
    %c0_43 = arith.constant 0 : index
    %118 = vector.load %arg2[%c12, %c0_43] : memref<24x128xf32, #tpu.memory_space<vmem>>, vector<1x8xf32>
    %c13 = arith.constant 13 : index
    %c0_44 = arith.constant 0 : index
    %119 = vector.load %arg2[%c13, %c0_44] : memref<24x128xf32, #tpu.memory_space<vmem>>, vector<1x8xf32>
    %cst_45 = arith.constant dense<0.000000e+00> : vector<8xf32>
    %120 = vector.multi_reduction <add>, %117, %cst_45 [1] : vector<8x8xf32> to vector<8xf32>
    %121 = vector.shape_cast %120 : vector<8xf32> to vector<8x1xf32>
    %122 = arith.mulf %117, %117 : vector<8x8xf32>
    %cst_46 = arith.constant dense<0.000000e+00> : vector<8xf32>
    %123 = vector.multi_reduction <add>, %122, %cst_46 [1] : vector<8x8xf32> to vector<8xf32>
    %124 = vector.shape_cast %123 : vector<8xf32> to vector<8x1xf32>
    %cst_47 = arith.constant 1.250000e-01 : f32
    %125 = vector.broadcast %cst_47 : f32 to vector<8x1xf32>
    %126 = arith.mulf %121, %125 : vector<8x1xf32>
    %cst_48 = arith.constant 1.250000e-01 : f32
    %127 = vector.broadcast %cst_48 : f32 to vector<8x1xf32>
    %128 = arith.mulf %124, %127 : vector<8x1xf32>
    %129 = arith.mulf %126, %126 : vector<8x1xf32>
    %130 = arith.subf %128, %129 : vector<8x1xf32>
    %131 = vector.broadcast %126 : vector<8x1xf32> to vector<8x8xf32>
    %132 = arith.subf %117, %131 : vector<8x8xf32>
    %cst_49 = arith.constant 9.99999974E-6 : f32
    %133 = vector.broadcast %cst_49 : f32 to vector<8x1xf32>
    %134 = arith.addf %130, %133 : vector<8x1xf32>
    %135 = math.rsqrt %134 : vector<8x1xf32>
    %136 = vector.broadcast %135 : vector<8x1xf32> to vector<8x8xf32>
    %137 = arith.mulf %132, %136 : vector<8x8xf32>
    %138 = vector.broadcast %118 : vector<1x8xf32> to vector<8x8xf32>
    %139 = arith.mulf %137, %138 : vector<8x8xf32>
    %140 = vector.broadcast %119 : vector<1x8xf32> to vector<8x8xf32>
    %141 = arith.addf %139, %140 : vector<8x8xf32>
    %c112 = arith.constant 112 : index
    %c0_50 = arith.constant 0 : index
    %142 = vector.load %arg3[%c112, %c0_50] : memref<224x128xbf16, #tpu.memory_space<vmem>>, vector<8x32xbf16>
    %c18 = arith.constant 18 : index
    %c0_51 = arith.constant 0 : index
    %143 = vector.load %arg2[%c18, %c0_51] : memref<24x128xf32, #tpu.memory_space<vmem>>, vector<1x32xf32>
    %144 = arith.truncf %141 : vector<8x8xf32> to vector<8x8xbf16>
    %cst_52 = arith.constant dense<0.000000e+00> : vector<8x32xf32>
    %145 = tpu.matmul %144, %142, %cst_52 {dimension_numbers = #tpu.dot_dimension_numbers<[1], [0], [0], [1], [0, 0, 1, 1], [], []>} : vector<8x8xbf16>, vector<8x32xbf16>, vector<8x32xf32> -> vector<8x32xf32>
    %146 = vector.broadcast %143 : vector<1x32xf32> to vector<8x32xf32>
    %147 = arith.addf %145, %146 : vector<8x32xf32>
    %cst_53 = arith.constant 0.000000e+00 : f32
    %148 = vector.broadcast %cst_53 : f32 to vector<8x32xf32>
    %149 = arith.maximumf %147, %148 : vector<8x32xf32>
    %c128 = arith.constant 128 : index
    %c0_54 = arith.constant 0 : index
    %150 = vector.load %arg3[%c128, %c0_54] : memref<224x128xbf16, #tpu.memory_space<vmem>>, vector<32x32xbf16>
    %c19 = arith.constant 19 : index
    %c0_55 = arith.constant 0 : index
    %151 = vector.load %arg2[%c19, %c0_55] : memref<24x128xf32, #tpu.memory_space<vmem>>, vector<1x32xf32>
    %152 = arith.truncf %149 : vector<8x32xf32> to vector<8x32xbf16>
    %cst_56 = arith.constant dense<0.000000e+00> : vector<8x32xf32>
    %153 = tpu.matmul %152, %150, %cst_56 {dimension_numbers = #tpu.dot_dimension_numbers<[1], [0], [0], [1], [0, 0, 1, 1], [], []>} : vector<8x32xbf16>, vector<32x32xbf16>, vector<8x32xf32> -> vector<8x32xf32>
    %154 = vector.broadcast %151 : vector<1x32xf32> to vector<8x32xf32>
    %155 = arith.addf %153, %154 : vector<8x32xf32>
    %c14 = arith.constant 14 : index
    %c0_57 = arith.constant 0 : index
    %156 = vector.load %arg2[%c14, %c0_57] : memref<24x128xf32, #tpu.memory_space<vmem>>, vector<1x32xf32>
    %c15 = arith.constant 15 : index
    %c0_58 = arith.constant 0 : index
    %157 = vector.load %arg2[%c15, %c0_58] : memref<24x128xf32, #tpu.memory_space<vmem>>, vector<1x32xf32>
    %cst_59 = arith.constant dense<0.000000e+00> : vector<8xf32>
    %158 = vector.multi_reduction <add>, %155, %cst_59 [1] : vector<8x32xf32> to vector<8xf32>
    %159 = vector.shape_cast %158 : vector<8xf32> to vector<8x1xf32>
    %160 = arith.mulf %155, %155 : vector<8x32xf32>
    %cst_60 = arith.constant dense<0.000000e+00> : vector<8xf32>
    %161 = vector.multi_reduction <add>, %160, %cst_60 [1] : vector<8x32xf32> to vector<8xf32>
    %162 = vector.shape_cast %161 : vector<8xf32> to vector<8x1xf32>
    %cst_61 = arith.constant 3.125000e-02 : f32
    %163 = vector.broadcast %cst_61 : f32 to vector<8x1xf32>
    %164 = arith.mulf %159, %163 : vector<8x1xf32>
    %cst_62 = arith.constant 3.125000e-02 : f32
    %165 = vector.broadcast %cst_62 : f32 to vector<8x1xf32>
    %166 = arith.mulf %162, %165 : vector<8x1xf32>
    %167 = arith.mulf %164, %164 : vector<8x1xf32>
    %168 = arith.subf %166, %167 : vector<8x1xf32>
    %169 = vector.broadcast %164 : vector<8x1xf32> to vector<8x32xf32>
    %170 = arith.subf %155, %169 : vector<8x32xf32>
    %cst_63 = arith.constant 9.99999974E-6 : f32
    %171 = vector.broadcast %cst_63 : f32 to vector<8x1xf32>
    %172 = arith.addf %168, %171 : vector<8x1xf32>
    %173 = math.rsqrt %172 : vector<8x1xf32>
    %174 = vector.broadcast %173 : vector<8x1xf32> to vector<8x32xf32>
    %175 = arith.mulf %170, %174 : vector<8x32xf32>
    %176 = vector.broadcast %156 : vector<1x32xf32> to vector<8x32xf32>
    %177 = arith.mulf %175, %176 : vector<8x32xf32>
    %178 = vector.broadcast %157 : vector<1x32xf32> to vector<8x32xf32>
    %179 = arith.addf %177, %178 : vector<8x32xf32>
    %cst_64 = arith.constant 0.000000e+00 : f32
    %180 = vector.broadcast %cst_64 : f32 to vector<8x32xf32>
    %181 = arith.maximumf %179, %180 : vector<8x32xf32>
    %c160 = arith.constant 160 : index
    %c0_65 = arith.constant 0 : index
    %182 = vector.load %arg3[%c160, %c0_65] : memref<224x128xbf16, #tpu.memory_space<vmem>>, vector<32x32xbf16>
    %c20 = arith.constant 20 : index
    %c0_66 = arith.constant 0 : index
    %183 = vector.load %arg2[%c20, %c0_66] : memref<24x128xf32, #tpu.memory_space<vmem>>, vector<1x32xf32>
    %184 = arith.truncf %181 : vector<8x32xf32> to vector<8x32xbf16>
    %cst_67 = arith.constant dense<0.000000e+00> : vector<8x32xf32>
    %185 = tpu.matmul %184, %182, %cst_67 {dimension_numbers = #tpu.dot_dimension_numbers<[1], [0], [0], [1], [0, 0, 1, 1], [], []>} : vector<8x32xbf16>, vector<32x32xbf16>, vector<8x32xf32> -> vector<8x32xf32>
    %186 = vector.broadcast %183 : vector<1x32xf32> to vector<8x32xf32>
    %187 = arith.addf %185, %186 : vector<8x32xf32>
    %188 = arith.addf %179, %187 : vector<8x32xf32>
    %c16_68 = arith.constant 16 : index
    %c0_69 = arith.constant 0 : index
    %189 = vector.load %arg2[%c16_68, %c0_69] : memref<24x128xf32, #tpu.memory_space<vmem>>, vector<1x32xf32>
    %c17 = arith.constant 17 : index
    %c0_70 = arith.constant 0 : index
    %190 = vector.load %arg2[%c17, %c0_70] : memref<24x128xf32, #tpu.memory_space<vmem>>, vector<1x32xf32>
    %cst_71 = arith.constant dense<0.000000e+00> : vector<8xf32>
    %191 = vector.multi_reduction <add>, %188, %cst_71 [1] : vector<8x32xf32> to vector<8xf32>
    %192 = vector.shape_cast %191 : vector<8xf32> to vector<8x1xf32>
    %193 = arith.mulf %188, %188 : vector<8x32xf32>
    %cst_72 = arith.constant dense<0.000000e+00> : vector<8xf32>
    %194 = vector.multi_reduction <add>, %193, %cst_72 [1] : vector<8x32xf32> to vector<8xf32>
    %195 = vector.shape_cast %194 : vector<8xf32> to vector<8x1xf32>
    %cst_73 = arith.constant 3.125000e-02 : f32
    %196 = vector.broadcast %cst_73 : f32 to vector<8x1xf32>
    %197 = arith.mulf %192, %196 : vector<8x1xf32>
    %cst_74 = arith.constant 3.125000e-02 : f32
    %198 = vector.broadcast %cst_74 : f32 to vector<8x1xf32>
    %199 = arith.mulf %195, %198 : vector<8x1xf32>
    %200 = arith.mulf %197, %197 : vector<8x1xf32>
    %201 = arith.subf %199, %200 : vector<8x1xf32>
    %202 = vector.broadcast %197 : vector<8x1xf32> to vector<8x32xf32>
    %203 = arith.subf %188, %202 : vector<8x32xf32>
    %cst_75 = arith.constant 9.99999974E-6 : f32
    %204 = vector.broadcast %cst_75 : f32 to vector<8x1xf32>
    %205 = arith.addf %201, %204 : vector<8x1xf32>
    %206 = math.rsqrt %205 : vector<8x1xf32>
    %207 = vector.broadcast %206 : vector<8x1xf32> to vector<8x32xf32>
    %208 = arith.mulf %203, %207 : vector<8x32xf32>
    %209 = vector.broadcast %189 : vector<1x32xf32> to vector<8x32xf32>
    %210 = arith.mulf %208, %209 : vector<8x32xf32>
    %211 = vector.broadcast %190 : vector<1x32xf32> to vector<8x32xf32>
    %212 = arith.addf %210, %211 : vector<8x32xf32>
    %cst_76 = arith.constant 0.000000e+00 : f32
    %213 = vector.broadcast %cst_76 : f32 to vector<8x32xf32>
    %214 = arith.maximumf %212, %213 : vector<8x32xf32>
    %c192 = arith.constant 192 : index
    %c0_77 = arith.constant 0 : index
    %215 = vector.load %arg3[%c192, %c0_77] : memref<224x128xbf16, #tpu.memory_space<vmem>>, vector<32x128xbf16>
    %c21 = arith.constant 21 : index
    %c0_78 = arith.constant 0 : index
    %216 = vector.load %arg2[%c21, %c0_78] : memref<24x128xf32, #tpu.memory_space<vmem>>, vector<1x128xf32>
    %217 = arith.truncf %214 : vector<8x32xf32> to vector<8x32xbf16>
    %cst_79 = arith.constant dense<0.000000e+00> : vector<8x128xf32>
    %218 = tpu.matmul %217, %215, %cst_79 {dimension_numbers = #tpu.dot_dimension_numbers<[1], [0], [0], [1], [0, 0, 1, 1], [], []>} : vector<8x32xbf16>, vector<32x128xbf16>, vector<8x128xf32> -> vector<8x128xf32>
    %219 = vector.broadcast %216 : vector<1x128xf32> to vector<8x128xf32>
    %220 = arith.addf %218, %219 : vector<8x128xf32>
    %c0_80 = arith.constant 0 : index
    %c0_81 = arith.constant 0 : index
    %221 = vector.load %arg4[%c0_80, %c0_81] : memref<8x128xf32, #tpu.memory_space<vmem>>, vector<8x128xf32>
    tpu.vector_store %arg4[%c0_80, %c0_81], %220 {strides = array<i32>} : memref<8x128xf32, #tpu.memory_space<vmem>>, vector<8x128xf32>,
    %c0_82 = arith.constant 0 : index
    %c0_83 = arith.constant 0 : index
    %222 = vector.load %arg4[%c0_82, %c0_83] : memref<8x128xf32, #tpu.memory_space<vmem>>, vector<8x8xf32>
    tpu.vector_store %arg4[%c0_82, %c0_83], %117 {strides = array<i32>} : memref<8x128xf32, #tpu.memory_space<vmem>>, vector<8x8xf32>,
    return
  }
  func.func @transform_0(%arg0: i32) -> (i32, i32) {
    %c0_i32 = arith.constant 0 : i32
    %c0_i32_0 = arith.constant 0 : i32
    return %arg0, %c0_i32 : i32, i32
  }
  func.func @transform_1(%arg0: i32) -> (i32, i32) {
    %c0_i32 = arith.constant 0 : i32
    %c0_i32_0 = arith.constant 0 : i32
    %c0_i32_1 = arith.constant 0 : i32
    return %c0_i32, %c0_i32_0 : i32, i32
  }
  func.func @transform_2(%arg0: i32) -> (i32, i32) {
    %c0_i32 = arith.constant 0 : i32
    %c0_i32_0 = arith.constant 0 : i32
    %c0_i32_1 = arith.constant 0 : i32
    return %c0_i32, %c0_i32_0 : i32, i32
  }
  func.func @transform_3(%arg0: i32) -> (i32, i32) {
    %c0_i32 = arith.constant 0 : i32
    %c0_i32_0 = arith.constant 0 : i32
    return %arg0, %c0_i32 : i32, i32
  }
}

</mosaic_0001>

<llo_original>
// kernel: tpu_custom_call.1
$region0: #{tpu_custom_call.1}
  #allocation0 [shape = 'u32[]', space=smem, size = 0x4, offset = 0x4, fixed_abs, tag = 'smem constant byte address 0x4 - core index']
  #allocation1 [shape = 'u32[72,128]{1,0:T(1,128)}', space=vmem, size = 0x9000, scoped, tag = 'internal scratch']
  %s0 = inlined_call_operand.hbm [shape: f32[8,16], index: 0, kind: input, shape index: {}]
  %s1 = inlined_call_operand.hbm [shape: f32[24,128], index: 1, kind: input, shape index: {}]
  %s2 = inlined_call_operand.hbm [shape: bf16[224,128], index: 2, kind: input, shape index: {}]
  %s3 = inlined_call_operand.hbm [shape: f32[8,128], index: 3, kind: output, shape index: {}]
  %s4 = sld [smem:[#allocation0]]
  $region34: #{tpu_custom_call.1} parent=0
    _
  %s6 = ssub.s32 1, %s4
  %s7 = scalar_select 0, %s6, %s4
  $region1: #{tpu_custom_call.1} parent=0
    #allocation2 [shape = 'u8[4096]{0}', space=vmem, size = 0x1000, scoped, tag = 'input window, operand 0, single buffered']
    #allocation3 [shape = 's32[1]{0}', space=sflag, size = 0x4, scoped, tag = 'scoped memory for tpu_custom_call.1']
    #allocation4 [shape = 's32[1]{0}', space=sflag, size = 0x4, scoped, tag = 'scoped memory for tpu_custom_call.1']
    #allocation5 [shape = 'u8[12288]{0}', space=vmem, size = 0x3000, scoped, tag = 'input window, operand 1, single buffered']
    #allocation6 [shape = 's32[1]{0}', space=sflag, size = 0x4, scoped, tag = 'scoped memory for tpu_custom_call.1']
    #allocation7 [shape = 'u8[57344]{0}', space=vmem, size = 0xe000, scoped, tag = 'input window, operand 2, single buffered']
    #allocation8 [shape = 'u8[4096]{0}', space=vmem, size = 0x1000, scoped, tag = 'output window, operand 0, single buffered']
    %8 = vsyncpa [#allocation3], 0
    %9 = vsyncpa [#allocation6], 0
    %10 = vsyncpa [#allocation4], 0
    // Predicated region
    $region2: #{tpu_custom_call.1} parent=1 // pred_check
      _
    $region3: #{tpu_custom_call.1} parent=1 // pred_check_branch
      %12 = sbr.rel (0) target = $region5
    $region4: #{tpu_custom_call.1} parent=1 // pred_region
      %14 = vsyncadd [#allocation3], 0
      %s16 = sshll.u32 %s0, 4
      %s17 = int_to_ptr.hbm [resolvable:$true] %s16
      %s18 = sshll.u32 [#allocation2], 4
      %s19 = int_to_ptr.vmem [resolvable:$true] %s18
      %21 = dma.hbm_to_vmem [thread:$0]  %s17, 128, %s19, [#allocation3]
    $region5: #{tpu_custom_call.1} parent=1 // pred_fallthru
      _
    // Predicated region
    $region6: #{tpu_custom_call.1} parent=1 // pred_check
      _
    $region7: #{tpu_custom_call.1} parent=1 // pred_check_branch
      %23 = sbr.rel (0) target = $region9
    $region8: #{tpu_custom_call.1} parent=1 // pred_region
      %25 = vsyncadd [#allocation6], 0
      %s26 = sshll.u32 %s1, 4
      %s27 = int_to_ptr.hbm [resolvable:$true] %s26
      %s28 = sshll.u32 [#allocation5], 4
      %s29 = int_to_ptr.vmem [resolvable:$true] %s28
      %34 = dma.hbm_to_vmem [thread:$0]  %s27, 384, %s29, [#allocation6], 128, 128, 8
    $region9: #{tpu_custom_call.1} parent=1 // pred_fallthru
      _
    // Predicated region
    $region10: #{tpu_custom_call.1} parent=1 // pred_check
      _
    $region11: #{tpu_custom_call.1} parent=1 // pred_check_branch
      %36 = sbr.rel (0) target = $region13
    $region12: #{tpu_custom_call.1} parent=1 // pred_region
      %38 = vsyncadd [#allocation6], 0
      %s39 = sshll.u32 %s2, 4
      %s40 = int_to_ptr.hbm [resolvable:$true] %s39
      %s41 = sshll.u32 [#allocation7], 4
      %s42 = int_to_ptr.vmem [resolvable:$true] %s41
      %47 = dma.hbm_to_vmem [thread:$0]  %s40, 1792, %s42, [#allocation6], 64, 64, 4
    $region13: #{tpu_custom_call.1} parent=1 // pred_fallthru
      _
    // Predicated region
    $region14: #{tpu_custom_call.1} parent=1 // pred_check
      _
    $region15: #{tpu_custom_call.1} parent=1 // pred_check_branch
      %49 = sbr.rel (0) target = $region17
    $region16: #{tpu_custom_call.1} parent=1 // pred_region
      %51 = dma.done [#allocation3], 128
    $region17: #{tpu_custom_call.1} parent=1 // pred_fallthru
      _
    // Predicated region
    $region18: #{tpu_custom_call.1} parent=1 // pred_check
      _
    $region19: #{tpu_custom_call.1} parent=1 // pred_check_branch
      %53 = sbr.rel (0) target = $region21
    $region20: #{tpu_custom_call.1} parent=1 // pred_region
      %55 = dma.done [#allocation6], 384
    $region21: #{tpu_custom_call.1} parent=1 // pred_fallthru
      _
    // Predicated region
    $region22: #{tpu_custom_call.1} parent=1 // pred_check
      _
    $region23: #{tpu_custom_call.1} parent=1 // pred_check_branch
      %57 = sbr.rel (0) target = $region25
    $region24: #{tpu_custom_call.1} parent=1 // pred_region
      %59 = dma.done [#allocation6], 1792
    $region25: #{tpu_custom_call.1} parent=1 // pred_fallthru
      _
    %v61 = vld [vmem:[#allocation2] sm:$0xff]
    %v62 = vld [vmem:[#allocation5] sm:$0x1]
    %v63 = vperm.slane %v62, 0
    %v64 = vsub.f32 %v61, %v63
    %v65 = vld [vmem:[#allocation5 + $0x1] sm:$0x1]
    %v66 = vadd.f32 %v65, 0.0001
    %v67 = vrsqrt.pop %v66
    %v68 = vmul.f32 %v67, %v66
    %v69 = vmul.f32 %v68, %v67
    %v70 = vmul.f32 0.5, %v69
    %v71 = vsub.f32 1.5, %v70
    %v72 = vmul.f32 %v67, %v71
    %vm73 = vweird.f32 %v66
    %vm74 = vweird.f32 %v67
    %vm75 = vmor %vm73, %vm74
    %v76 = vsel %vm75, %v67, %v72
    %v77 = vperm.slane %v76, 0
    %v78 = vmul.f32 %v64, %v77
    %v79 = vmax.f32 %v78, -1000.0
    %v80 = vmin.f32 %v79, 1000.0
    %v81 = vld [vmem:[#allocation5 + $0x2] sm:$0x1]
    %v82 = vld [vmem:[#allocation5 + $0x3] sm:$0x1]
    %vm83 = vcmask 130048
    %v84 = vsel %vm83, %v80, 0.0
    %85 = vadd.xlane.f32.xlu0 %v84
    %v86 = vpop.xlane.xlu0 %85
    %v87 = vmul.f32 %v80, %v80
    %v88 = vsel %vm83, %v87, 0.0
    %89 = vadd.xlane.f32.xlu0 %v88
    %v90 = vpop.xlane.xlu0 %89
    %v91 = vmul.f32 %v86, 0.0625
    %v92 = vmul.f32 %v90, 0.0625
    %v93 = vmul.f32 %v91, %v91
    %v94 = vsub.f32 %v92, %v93
    %v95 = vsub.f32 %v80, %v91
    %v96 = vadd.f32 %v94, 1e-05
    %v97 = vrsqrt.pop %v96
    %v98 = vmul.f32 %v97, %v96
    %v99 = vmul.f32 %v98, %v97
    %v100 = vmul.f32 0.5, %v99
    %v101 = vsub.f32 1.5, %v100
    %v102 = vmul.f32 %v97, %v101
    %vm103 = vweird.f32 %v96
    %vm104 = vweird.f32 %v97
    %vm105 = vmor %vm103, %vm104
    %v106 = vsel %vm105, %v97, %v102
    %v107 = vmul.f32 %v95, %v106
    %v108 = vperm.slane %v81, 0
    %v109 = vmul.f32 %v107, %v108
    %v110 = vperm.slane %v82, 0
    %v111 = vadd.f32 %v109, %v110
    %v112 = vld [vmem:[#allocation7] sm:$0xf]
    %v113 = vld [vmem:[#allocation7 + $0x4] sm:$0xf]
    %v114 = vld [vmem:[#allocation5 + $0x8] sm:$0x1]
    %v115 = vpack.c.bf16 %v111, %v111
    %v116 = vperm.slane %v114, 0
    %v119 = vunpack.c.l.b16 %v112
    %v120 = vunpack.c.l.b16 %v113
    %v121 = vpack.c.b16 %v120, %v119
    %v124 = vsel %vm83, %v115, 0
    %126 = vmatpush.bf16.msra.mxu0 0
    %127 = vmatpush.bf16.msra.mxu0 0
    %128 = vmatpush.bf16.msra.mxu0 0
    %129 = vmatpush.bf16.msra.mxu0 0
    %130 = vmatpush.bf16.msra.mxu0 0
    %131 = vmatpush.bf16.msra.mxu0 0
    %132 = vmatpush.bf16.msra.mxu0 0
    %133 = vmatpush.bf16.msra.mxu0 %v121
    %134 = vmatmul.bf16.gmra.mxu0 %v124
    %v135 = vpop.f32.mrf.mxu0
    %v136 = vadd.f32 %v116, %v135
    %v137 = vpop.f32.mrf.mxu0
    %138 = vdwg.mxu0
    %v139 = vmax.f32 %v136, 0.0
    %v140 = vld [vmem:[#allocation7 + $0x8] sm:$0xf]
    %v141 = vld [vmem:[#allocation7 + $0xc] sm:$0xf]
    %v142 = vld [vmem:[#allocation7 + $0x10] sm:$0xf]
    %v143 = vld [vmem:[#allocation7 + $0x14] sm:$0xf]
    %v144 = vld [vmem:[#allocation5 + $0x9] sm:$0x1]
    %v145 = vpack.c.bf16 %v139, %v139
    %v146 = vperm.slane %v144, 0
    %v151 = vunpack.c.l.b16 %v140
    %v152 = vunpack.c.l.b16 %v141
    %v153 = vunpack.c.l.b16 %v142
    %v154 = vunpack.c.l.b16 %v143
    %v155 = vpack.c.b16 %v152, %v151
    %v156 = vpack.c.b16 %v154, %v153
    %vm159 = vcmask 261120
    %v161 = vsel %vm159, %v145, 0
    %163 = vmatpush.bf16.msra.mxu0 0
    %164 = vmatpush.bf16.msra.mxu0 0
    %165 = vmatpush.bf16.msra.mxu0 0
    %166 = vmatpush.bf16.msra.mxu0 0
    %167 = vmatpush.bf16.msra.mxu0 0
    %168 = vmatpush.bf16.msra.mxu0 0
    %169 = vmatpush.bf16.msra.mxu0 %v156
    %170 = vmatpush.bf16.msra.mxu0 %v155
    %171 = vmatmul.bf16.gmra.mxu0 %v161
    %v172 = vpop.f32.mrf.mxu0
    %v173 = vadd.f32 %v146, %v172
    %v174 = vpop.f32.mrf.mxu0
    %175 = vdwg.mxu0
    %v176 = vld [vmem:[#allocation5 + $0x4] sm:$0x1]
    %v177 = vld [vmem:[#allocation5 + $0x5] sm:$0x1]
    %v178 = vsel %vm159, %v173, 0.0
    %179 = vadd.xlane.f32.xlu0 %v178
    %v180 = vpop.xlane.xlu0 %179
    %v181 = vmul.f32 %v173, %v173
    %v182 = vsel %vm159, %v181, 0.0
    %183 = vadd.xlane.f32.xlu0 %v182
    %v184 = vpop.xlane.xlu0 %183
    %v185 = vmul.f32 %v180, 0.03125
    %v186 = vmul.f32 %v184, 0.03125
    %v187 = vmul.f32 %v185, %v185
    %v188 = vsub.f32 %v186, %v187
    %v189 = vsub.f32 %v173, %v185
    %v190 = vadd.f32 %v188, 1e-05
    %v191 = vrsqrt.pop %v190
    %v192 = vmul.f32 %v191, %v190
    %v193 = vmul.f32 %v192, %v191
    %v194 = vmul.f32 0.5, %v193
    %v195 = vsub.f32 1.5, %v194
    %v196 = vmul.f32 %v191, %v195
    %vm197 = vweird.f32 %v190
    %vm198 = vweird.f32 %v191
    %vm199 = vmor %vm197, %vm198
    %v200 = vsel %vm199, %v191, %v196
    %v201 = vmul.f32 %v189, %v200
    %v202 = vperm.slane %v176, 0
    %v203 = vmul.f32 %v201, %v202
    %v204 = vperm.slane %v177, 0
    %v205 = vadd.f32 %v203, %v204
    %v206 = vmax.f32 %v205, 0.0
    %v207 = vld [vmem:[#allocation7 + $0x18] sm:$0xf]
    %v208 = vld [vmem:[#allocation7 + $0x1c] sm:$0xf]
    %v209 = vld [vmem:[#allocation7 + $0x20] sm:$0xf]
    %v210 = vld [vmem:[#allocation7 + $0x24] sm:$0xf]
    %v211 = vld [vmem:[#allocation5 + $0xa] sm:$0x1]
    %v212 = vpack.c.bf16 %v206, %v206
    %v213 = vperm.slane %v211, 0
    %v218 = vunpack.c.l.b16 %v207
    %v219 = vunpack.c.l.b16 %v208
    %v220 = vunpack.c.l.b16 %v209
    %v221 = vunpack.c.l.b16 %v210
    %v222 = vpack.c.b16 %v219, %v218
    %v223 = vpack.c.b16 %v221, %v220
    %v227 = vsel %vm159, %v212, 0
    %229 = vmatpush.bf16.msra.mxu0 0
    %230 = vmatpush.bf16.msra.mxu0 0
    %231 = vmatpush.bf16.msra.mxu0 0
    %232 = vmatpush.bf16.msra.mxu0 0
    %233 = vmatpush.bf16.msra.mxu0 0
    %234 = vmatpush.bf16.msra.mxu0 0
    %235 = vmatpush.bf16.msra.mxu0 %v223
    %236 = vmatpush.bf16.msra.mxu0 %v222
    %237 = vmatmul.bf16.gmra.mxu0 %v227
    %v238 = vpop.f32.mrf.mxu0
    %v239 = vadd.f32 %v213, %v238
    %v240 = vpop.f32.mrf.mxu0
    %241 = vdwg.mxu0
    %v242 = vadd.f32 %v205, %v239
    %v243 = vld [vmem:[#allocation5 + $0x6] sm:$0x1]
    %v244 = vld [vmem:[#allocation5 + $0x7] sm:$0x1]
    %v245 = vsel %vm159, %v242, 0.0
    %246 = vadd.xlane.f32.xlu0 %v245
    %v247 = vpop.xlane.xlu0 %246
    %v248 = vmul.f32 %v242, %v242
    %v249 = vsel %vm159, %v248, 0.0
    %250 = vadd.xlane.f32.xlu0 %v249
    %v251 = vpop.xlane.xlu0 %250
    %v252 = vmul.f32 %v247, 0.03125
    %v253 = vmul.f32 %v251, 0.03125
    %v254 = vmul.f32 %v252, %v252
    %v255 = vsub.f32 %v253, %v254
    %v256 = vsub.f32 %v242, %v252
    %v257 = vadd.f32 %v255, 1e-05
    %v258 = vrsqrt.pop %v257
    %v259 = vmul.f32 %v258, %v257
    %v260 = vmul.f32 %v259, %v258
    %v261 = vmul.f32 0.5, %v260
    %v262 = vsub.f32 1.5, %v261
    %v263 = vmul.f32 %v258, %v262
    %vm264 = vweird.f32 %v257
    %vm265 = vweird.f32 %v258
    %vm266 = vmor %vm264, %vm265
    %v267 = vsel %vm266, %v258, %v263
    %v268 = vmul.f32 %v256, %v267
    %v269 = vperm.slane %v243, 0
    %v270 = vmul.f32 %v268, %v269
    %v271 = vperm.slane %v244, 0
    %v272 = vadd.f32 %v270, %v271
    %v273 = vmax.f32 %v272, 0.0
    %v274 = vld [vmem:[#allocation7 + $0x28] sm:$0xf]
    %v275 = vld [vmem:[#allocation7 + $0x2c] sm:$0xf]
    %v276 = vld [vmem:[#allocation7 + $0x30] sm:$0xf]
    %v277 = vld [vmem:[#allocation7 + $0x34] sm:$0xf]
    %v278 = vld [vmem:[#allocation5 + $0xb] sm:$0x1]
    %v279 = vpack.c.bf16 %v273, %v273
    %v280 = vperm.slane %v278, 0
    %v285 = vunpack.c.l.b16 %v274
    %v286 = vunpack.c.l.b16 %v275
    %v287 = vunpack.c.l.b16 %v276
    %v288 = vunpack.c.l.b16 %v277
    %v289 = vpack.c.b16 %v286, %v285
    %v290 = vpack.c.b16 %v288, %v287
    %v294 = vsel %vm159, %v279, 0
    %296 = vmatpush.bf16.msra.mxu0 0
    %297 = vmatpush.bf16.msra.mxu0 0
    %298 = vmatpush.bf16.msra.mxu0 0
    %299 = vmatpush.bf16.msra.mxu0 0
    %300 = vmatpush.bf16.msra.mxu0 0
    %301 = vmatpush.bf16.msra.mxu0 0
    %302 = vmatpush.bf16.msra.mxu0 %v290
    %303 = vmatpush.bf16.msra.mxu0 %v289
    %304 = vmatmul.bf16.gmra.mxu0 %v294
    %v305 = vpop.f32.mrf.mxu0
    %v306 = vadd.f32 %v280, %v305
    %v307 = vpop.f32.mrf.mxu0
    %308 = vdwg.mxu0
    %v309 = vtanh.pop %v306
    %v310 = vld [vmem:[#allocation5 + $0xc] sm:$0x1]
    %v311 = vld [vmem:[#allocation5 + $0xd] sm:$0x1]
    %vm312 = vcmask 64512
    %v313 = vsel %vm312, %v309, 0.0
    %314 = vadd.xlane.f32.xlu0 %v313
    %v315 = vpop.xlane.xlu0 %314
    %v316 = vmul.f32 %v309, %v309
    %v317 = vsel %vm312, %v316, 0.0
    %318 = vadd.xlane.f32.xlu0 %v317
    %v319 = vpop.xlane.xlu0 %318
    %v320 = vmul.f32 %v315, 0.125
    %v321 = vmul.f32 %v319, 0.125
    %v322 = vmul.f32 %v320, %v320
    %v323 = vsub.f32 %v321, %v322
    %v324 = vsub.f32 %v309, %v320
    %v325 = vadd.f32 %v323, 1e-05
    %v326 = vrsqrt.pop %v325
    %v327 = vmul.f32 %v326, %v325
    %v328 = vmul.f32 %v327, %v326
    %v329 = vmul.f32 0.5, %v328
    %v330 = vsub.f32 1.5, %v329
    %v331 = vmul.f32 %v326, %v330
    %vm332 = vweird.f32 %v325
    %vm333 = vweird.f32 %v326
    %vm334 = vmor %vm332, %vm333
    %v335 = vsel %vm334, %v326, %v331
    %v336 = vmul.f32 %v324, %v335
    %v337 = vperm.slane %v310, 0
    %v338 = vmul.f32 %v336, %v337
    %v339 = vperm.slane %v311, 0
    %v340 = vadd.f32 %v338, %v339
    %v341 = vld [vmem:[#allocation7 + $0x38] sm:$0xf]
    %v342 = vld [vmem:[#allocation5 + $0x12] sm:$0x1]
    %v343 = vpack.c.bf16 %v340, %v340
    %v344 = vperm.slane %v342, 0
    %v346 = vsel %vm312, %v343, 0
    %vm348 = vcmask 1043456
    %v350 = vsel %vm348, %v341, 0
    %352 = vmatpush.bf16.msra.mxu0 0
    %353 = vmatpush.bf16.msra.mxu0 0
    %354 = vmatpush.bf16.msra.mxu0 0
    %355 = vmatpush.bf16.msra.mxu0 0
    %356 = vmatpush.bf16.msra.mxu0 0
    %357 = vmatpush.bf16.msra.mxu0 0
    %358 = vmatpush.bf16.msra.mxu0 0
    %359 = vmatpush.bf16.msra.mxu0 %v350
    %360 = vmatmul.bf16.gmra.mxu0 %v346
    %v361 = vpop.f32.mrf.mxu0
    %v362 = vadd.f32 %v344, %v361
    %v363 = vpop.f32.mrf.mxu0
    %364 = vdwg.mxu0
    %v365 = vmax.f32 %v362, 0.0
    %v366 = vld [vmem:[#allocation7 + $0x40] sm:$0xf]
    %v367 = vld [vmem:[#allocation7 + $0x44] sm:$0xf]
    %v368 = vld [vmem:[#allocation7 + $0x48] sm:$0xf]
    %v369 = vld [vmem:[#allocation7 + $0x4c] sm:$0xf]
    %v370 = vld [vmem:[#allocation5 + $0x13] sm:$0x1]
    %v371 = vpack.c.bf16 %v365, %v365
    %v372 = vperm.slane %v370, 0
    %v377 = vunpack.c.l.b16 %v366
    %v378 = vunpack.c.l.b16 %v367
    %v379 = vunpack.c.l.b16 %v368
    %v380 = vunpack.c.l.b16 %v369
    %v381 = vpack.c.b16 %v378, %v377
    %v382 = vpack.c.b16 %v380, %v379
    %v386 = vsel %vm159, %v371, 0
    %388 = vmatpush.bf16.msra.mxu0 0
    %389 = vmatpush.bf16.msra.mxu0 0
    %390 = vmatpush.bf16.msra.mxu0 0
    %391 = vmatpush.bf16.msra.mxu0 0
    %392 = vmatpush.bf16.msra.mxu0 0
    %393 = vmatpush.bf16.msra.mxu0 0
    %394 = vmatpush.bf16.msra.mxu0 %v382
    %395 = vmatpush.bf16.msra.mxu0 %v381
    %396 = vmatmul.bf16.gmra.mxu0 %v386
    %v397 = vpop.f32.mrf.mxu0
    %v398 = vadd.f32 %v372, %v397
    %v399 = vpop.f32.mrf.mxu0
    %400 = vdwg.mxu0
    %v401 = vld [vmem:[#allocation5 + $0xe] sm:$0x1]
    %v402 = vld [vmem:[#allocation5 + $0xf] sm:$0x1]
    %v403 = vsel %vm159, %v398, 0.0
    %404 = vadd.xlane.f32.xlu0 %v403
    %v405 = vpop.xlane.xlu0 %404
    %v406 = vmul.f32 %v398, %v398
    %v407 = vsel %vm159, %v406, 0.0
    %408 = vadd.xlane.f32.xlu0 %v407
    %v409 = vpop.xlane.xlu0 %408
    %v410 = vmul.f32 %v405, 0.03125
    %v411 = vmul.f32 %v409, 0.03125
    %v412 = vmul.f32 %v410, %v410
    %v413 = vsub.f32 %v411, %v412
    %v414 = vsub.f32 %v398, %v410
    %v415 = vadd.f32 %v413, 1e-05
    %v416 = vrsqrt.pop %v415
    %v417 = vmul.f32 %v416, %v415
    %v418 = vmul.f32 %v417, %v416
    %v419 = vmul.f32 0.5, %v418
    %v420 = vsub.f32 1.5, %v419
    %v421 = vmul.f32 %v416, %v420
    %vm422 = vweird.f32 %v415
    %vm423 = vweird.f32 %v416
    %vm424 = vmor %vm422, %vm423
    %v425 = vsel %vm424, %v416, %v421
    %v426 = vmul.f32 %v414, %v425
    %v427 = vperm.slane %v401, 0
    %v428 = vmul.f32 %v426, %v427
    %v429 = vperm.slane %v402, 0
    %v430 = vadd.f32 %v428, %v429
    %v431 = vmax.f32 %v430, 0.0
    %v432 = vld [vmem:[#allocation7 + $0x50] sm:$0xf]
    %v433 = vld [vmem:[#allocation7 + $0x54] sm:$0xf]
    %v434 = vld [vmem:[#allocation7 + $0x58] sm:$0xf]
    %v435 = vld [vmem:[#allocation7 + $0x5c] sm:$0xf]
    %v436 = vld [vmem:[#allocation5 + $0x14] sm:$0x1]
    %v437 = vpack.c.bf16 %v431, %v431
    %v438 = vperm.slane %v436, 0
    %v443 = vunpack.c.l.b16 %v432
    %v444 = vunpack.c.l.b16 %v433
    %v445 = vunpack.c.l.b16 %v434
    %v446 = vunpack.c.l.b16 %v435
    %v447 = vpack.c.b16 %v444, %v443
    %v448 = vpack.c.b16 %v446, %v445
    %v452 = vsel %vm159, %v437, 0
    %454 = vmatpush.bf16.msra.mxu0 0
    %455 = vmatpush.bf16.msra.mxu0 0
    %456 = vmatpush.bf16.msra.mxu0 0
    %457 = vmatpush.bf16.msra.mxu0 0
    %458 = vmatpush.bf16.msra.mxu0 0
    %459 = vmatpush.bf16.msra.mxu0 0
    %460 = vmatpush.bf16.msra.mxu0 %v448
    %461 = vmatpush.bf16.msra.mxu0 %v447
    %462 = vmatmul.bf16.gmra.mxu0 %v452
    %v463 = vpop.f32.mrf.mxu0
    %v464 = vadd.f32 %v438, %v463
    %v465 = vpop.f32.mrf.mxu0
    %466 = vdwg.mxu0
    %v467 = vadd.f32 %v430, %v464
    %v468 = vld [vmem:[#allocation5 + $0x10] sm:$0x1]
    %v469 = vld [vmem:[#allocation5 + $0x11] sm:$0x1]
    %v470 = vsel %vm159, %v467, 0.0
    %471 = vadd.xlane.f32.xlu0 %v470
    %v472 = vpop.xlane.xlu0 %471
    %v473 = vmul.f32 %v467, %v467
    %v474 = vsel %vm159, %v473, 0.0
    %475 = vadd.xlane.f32.xlu0 %v474
    %v476 = vpop.xlane.xlu0 %475
    %v477 = vmul.f32 %v472, 0.03125
    %v478 = vmul.f32 %v476, 0.03125
    %v479 = vmul.f32 %v477, %v477
    %v480 = vsub.f32 %v478, %v479
    %v481 = vsub.f32 %v467, %v477
    %v482 = vadd.f32 %v480, 1e-05
    %v483 = vrsqrt.pop %v482
    %v484 = vmul.f32 %v483, %v482
    %v485 = vmul.f32 %v484, %v483
    %v486 = vmul.f32 0.5, %v485
    %v487 = vsub.f32 1.5, %v486
    %v488 = vmul.f32 %v483, %v487
    %vm489 = vweird.f32 %v482
    %vm490 = vweird.f32 %v483
    %vm491 = vmor %vm489, %vm490
    %v492 = vsel %vm491, %v483, %v488
    %v493 = vmul.f32 %v481, %v492
    %v494 = vperm.slane %v468, 0
    %v495 = vmul.f32 %v493, %v494
    %v496 = vperm.slane %v469, 0
    %v497 = vadd.f32 %v495, %v496
    %v498 = vmax.f32 %v497, 0.0
    %v499 = vld [vmem:[#allocation7 + $0x60] sm:$0xf]
    %v500 = vld [vmem:[#allocation7 + $0x64] sm:$0xf]
    %v501 = vld [vmem:[#allocation7 + $0x68] sm:$0xf]
    %v502 = vld [vmem:[#allocation7 + $0x6c] sm:$0xf]
    %v503 = vld [vmem:[#allocation5 + $0x15] sm:$0x1]
    %v504 = vpack.c.bf16 %v498, %v498
    %v505 = vperm.slane %v503, 0
    %v510 = vunpack.c.l.b16 %v499
    %v511 = vunpack.c.l.b16 %v500
    %v512 = vunpack.c.l.b16 %v501
    %v513 = vunpack.c.l.b16 %v502
    %v514 = vpack.c.b16 %v511, %v510
    %v515 = vpack.c.b16 %v513, %v512
    %v519 = vsel %vm159, %v504, 0
    %521 = vmatpush.bf16.msra.mxu0 0
    %522 = vmatpush.bf16.msra.mxu0 0
    %523 = vmatpush.bf16.msra.mxu0 0
    %524 = vmatpush.bf16.msra.mxu0 0
    %525 = vmatpush.bf16.msra.mxu0 0
    %526 = vmatpush.bf16.msra.mxu0 0
    %527 = vmatpush.bf16.msra.mxu0 %v515
    %528 = vmatpush.bf16.msra.mxu0 %v514
    %529 = vmatmul.bf16.gmra.mxu0 %v519
    %v530 = vpop.f32.mrf.mxu0
    %v531 = vadd.f32 %v505, %v530
    %v532 = vpop.f32.mrf.mxu0
    %533 = vdwg.mxu0
    %534 = vst [vmem:[#allocation8] sm:$0xff] %v531
    %535 = vst.msk [vmem:[#allocation8] sm:$0xff] %vm312, %v309
    // Predicated region
    $region26: #{tpu_custom_call.1} parent=1 // pred_check
      _
    $region27: #{tpu_custom_call.1} parent=1 // pred_check_branch
      %537 = sbr.rel (0) target = $region29
    $region28: #{tpu_custom_call.1} parent=1 // pred_region
      %539 = vsyncadd [#allocation4], 0
      %s541 = sshll.u32 [#allocation8], 4
      %s542 = int_to_ptr.vmem [resolvable:$true] %s541
      %s543 = sshll.u32 %s3, 4
      %s544 = int_to_ptr.hbm [resolvable:$true] %s543
      %546 = dma.vmem_to_hbm [thread:$0]  %s542, 128, %s544, [#allocation4]
    $region29: #{tpu_custom_call.1} parent=1 // pred_fallthru
      _
    // Predicated region
    $region30: #{tpu_custom_call.1} parent=1 // pred_check
      _
    $region31: #{tpu_custom_call.1} parent=1 // pred_check_branch
      %548 = sbr.rel (0) target = $region33
    $region32: #{tpu_custom_call.1} parent=1 // pred_region
      %550 = dma.done [#allocation4], 128
    $region33: #{tpu_custom_call.1} parent=1 // pred_fallthru
      _
    %551 = vsyncpa [#allocation3], 1
    %552 = vsyncpa [#allocation6], 1
    %553 = vsyncpa [#allocation4], 1

</llo_original>
